<compile_context>
chip_gen: v7x
topology: tpu7x:2x2x1
jax: 0.10.0
libtpu: 0.0.40
codegen_flags: <defaults>
</compile_context>

<pallas_src>
import functools

import jax
import jax.numpy as jnp
from jax.experimental import pallas as pl
from jax.experimental.pallas import tpu as pltpu


def _round_up(x: int, m: int) -> int:
    return (x + m - 1) // m * m


def _mlp_actor_kernel(max_action, n_linear, compute_dtype, *refs):
    """refs = (obs_ref, w0, b0, w1, b1, ..., w_out, b_out, out_ref)."""
    obs_ref = refs[0]
    param_refs = refs[1:1 + 2 * n_linear]
    out_ref = refs[1 + 2 * n_linear]

    # Hoist all weight/bias loads + casts out of the layer loop (loaded once
    # per grid step; weights are grid-resident via their constant index_map).
    ws = [param_refs[2 * i][...].astype(compute_dtype) for i in range(n_linear)]
    bs = [param_refs[2 * i + 1][...].astype(jnp.float32) for i in range(n_linear)]

    x = obs_ref[...].astype(jnp.float32)
    for i in range(n_linear):
        # MXU matmul: bf16 (or f32) operands, f32 accumulation.
        y = jnp.dot(x.astype(compute_dtype), ws[i],
                    preferred_element_type=jnp.float32) + bs[i]
        if i < n_linear - 1:
            x = jnp.maximum(y, 0.0)          # ReLU in f32 (VPU)
        else:
            x = jnp.tanh(y)                  # Tanh in f32 (EUP)
    out_ref[...] = (x * max_action).astype(out_ref.dtype)


def mlp_actor_forward(obs, params, max_action, *, tile_b=256,
                      compute_dtype=jnp.bfloat16):
    """Run the MlpActor forward pass in a single batch-tiled Pallas call.

    obs:    (B, obs_dim) float32
    params: flat list [w0, b0, w1, b1, ..., w_out, b_out]
            w_i: (in_features, out_features), b_i: (1, out_features)
    """
    B, obs_dim = obs.shape
    action_dim = params[-1].shape[-1]
    n_linear = len(params) // 2

    # --- pad feature dims to multiples of 128 (lane-dense), batch tile to 8 ---
    dims = [obs_dim] + [w.shape[1] for w in params[0::2]]
    pad_dims = [_round_up(d, 128) for d in dims]

    tile_b = _round_up(max(8, min(tile_b, _round_up(B, 8))), 8)
    # TODO(synk): on v7x (64 MiB VMEM) re-derive tile_b if hidden_dim is large
    # so 2*double-buffered activation tiles + resident weights stay well under
    # the scoped VMEM limit.
    B_pad = _round_up(B, tile_b)

    obs_p = jnp.pad(obs, ((0, B_pad - B), (0, pad_dims[0] - obs_dim)))
    padded_params = []
    for i in range(n_linear):
        w, b = params[2 * i], params[2 * i + 1]
        pi, po = pad_dims[i], pad_dims[i + 1]
        padded_params.append(jnp.pad(w, ((0, pi - w.shape[0]), (0, po - w.shape[1]))))
        padded_params.append(jnp.pad(b, ((0, 0), (0, po - b.shape[1]))))

    grid = (B_pad // tile_b,)

    # --- specs: obs/out tiled over batch, weights/biases full-array resident ---
    in_specs = [pl.BlockSpec((tile_b, pad_dims[0]), lambda i: (i, 0))]
    for p in padded_params:
        in_specs.append(pl.BlockSpec(p.shape, lambda i: (0, 0)))
    out_specs = pl.BlockSpec((tile_b, pad_dims[-1]), lambda i: (i, 0))

    # --- advisory cost estimate for the XLA scheduler ---
    flops = 2 * B_pad * sum(pad_dims[i] * pad_dims[i + 1] for i in range(n_linear))
    bytes_accessed = (obs_p.size * obs_p.dtype.itemsize
                      + sum(p.size * p.dtype.itemsize for p in padded_params)
                      + B_pad * pad_dims[-1] * jnp.dtype(obs.dtype).itemsize)
    cost_estimate = pl.CostEstimate(flops=int(flops),
                                    transcendentals=int(B_pad * pad_dims[-1]),
                                    bytes_accessed=int(bytes_accessed))

    kernel = functools.partial(_mlp_actor_kernel, float(max_action), n_linear,
                               compute_dtype)

    out_padded = pl.pallas_call(
        kernel,
        out_shape=jax.ShapeDtypeStruct((B_pad, pad_dims[-1]), obs.dtype),
        grid=grid,
        in_specs=in_specs,
        out_specs=out_specs,
        compiler_params=pltpu.CompilerParams(
            dimension_semantics=("parallel",)),
        cost_estimate=cost_estimate,
    )(obs_p, *padded_params)

    return out_padded[:B, :action_dim]


def init_mlp_actor_params(key, obs_dim, action_dim, hidden_dim, n_layers):
    """Deterministic init mimicking nn.Linear's U(-1/sqrt(fan_in), +1/sqrt(fan_in))."""
    dims = [obs_dim] + [hidden_dim] * n_layers + [action_dim]
    params = []
    for fan_in, fan_out in zip(dims[:-1], dims[1:]):
        key, kw, kb = jax.random.split(key, 3)
        bound = 1.0 / jnp.sqrt(float(fan_in))
        w = jax.random.uniform(kw, (fan_in, fan_out), jnp.float32, -bound, bound)
        b = jax.random.uniform(kb, (1, fan_out), jnp.float32, -bound, bound)
        params += [w, b]
    return params


def mlp_actor_reference(obs, params, max_action):
    """Pure-JAX f32 reference for correctness checking."""
    x = obs
    n_linear = len(params) // 2
    for i in range(n_linear - 1):
        x = jnp.maximum(x @ params[2 * i] + params[2 * i + 1], 0.0)
    x = jnp.tanh(x @ params[-2] + params[-1])
    return x * max_action


if __name__ == "__main__":
    # Small shapes consistent with the module: 1-D observation only.
    batch = 2
    obs_dim = 16
    action_dim = 4
    hidden_dim = 32
    n_layers = 2
    max_action = 1.5

    key = jax.random.PRNGKey(0)
    key, k_obs = jax.random.split(key)
    obs = jax.random.normal(k_obs, (batch, obs_dim), jnp.float32)

    params = init_mlp_actor_params(key, obs_dim, action_dim, hidden_dim, n_layers)

    # --- demo shape (single grid step) ---
    out = mlp_actor_forward(obs, params, max_action)
    out = jax.block_until_ready(out)
    ref = mlp_actor_reference(obs, params, max_action)
    assert out.shape == (batch, action_dim)
    # bf16 matmul operands vs f32 reference: loose-but-safe tolerance.
    assert jnp.allclose(out, ref, atol=3e-2, rtol=3e-2), "mismatch vs reference"

    # --- exercise the batch grid (>1 tile) and padding paths ---
    key, k_obs2 = jax.random.split(key)
    obs_big = jax.random.normal(k_obs2, (64, obs_dim), jnp.float32)
    out_big = jax.block_until_ready(
        mlp_actor_forward(obs_big, params, max_action, tile_b=16))
    ref_big = mlp_actor_reference(obs_big, params, max_action)
    assert out_big.shape == (64, action_dim)
    assert jnp.allclose(out_big, ref_big, atol=3e-2, rtol=3e-2), "mismatch (tiled)"

    print("KERNEL_OK")
</pallas_src>

<mosaic_0001>
module attributes {stable_mosaic.version = 11 : i64} {
  func.func @_mlp_actor_kernel(%arg0: i32, %arg1: memref<8x128xf32, #tpu.memory_space<vmem>>, %arg2: memref<128x128xf32, #tpu.memory_space<vmem>>, %arg3: memref<1x128xf32, #tpu.memory_space<vmem>>, %arg4: memref<128x128xf32, #tpu.memory_space<vmem>>, %arg5: memref<1x128xf32, #tpu.memory_space<vmem>>, %arg6: memref<128x128xf32, #tpu.memory_space<vmem>>, %arg7: memref<1x128xf32, #tpu.memory_space<vmem>>, %arg8: memref<8x128xf32, #tpu.memory_space<vmem>>) attributes {dimension_semantics = [#tpu.dimension_semantics<parallel>], iteration_bounds = array<i64: 1>, scalar_prefetch = 0 : i64, scratch_operands = 0 : i64, tpu.core_type = #tpu.core_type<tc>, window_params = [{transform_indices = @transform_0, window_bounds = array<i64: 8, 128>}, {pipeline_mode = #tpu.pipeline_mode<synchronous>, transform_indices = @transform_1, window_bounds = array<i64: 128, 128>}, {pipeline_mode = #tpu.pipeline_mode<synchronous>, transform_indices = @transform_2, window_bounds = array<i64: 1, 128>}, {pipeline_mode = #tpu.pipeline_mode<synchronous>, transform_indices = @transform_3, window_bounds = array<i64: 128, 128>}, {pipeline_mode = #tpu.pipeline_mode<synchronous>, transform_indices = @transform_4, window_bounds = array<i64: 1, 128>}, {pipeline_mode = #tpu.pipeline_mode<synchronous>, transform_indices = @transform_5, window_bounds = array<i64: 128, 128>}, {pipeline_mode = #tpu.pipeline_mode<synchronous>, transform_indices = @transform_6, window_bounds = array<i64: 1, 128>}, {transform_indices = @transform_7, window_bounds = array<i64: 8, 128>}]} {
    %c0 = arith.constant 0 : index
    %c0_0 = arith.constant 0 : index
    %0 = vector.load %arg2[%c0, %c0_0] : memref<128x128xf32, #tpu.memory_space<vmem>>, vector<128x128xf32>
    %1 = arith.truncf %0 : vector<128x128xf32> to vector<128x128xbf16>
    %c0_1 = arith.constant 0 : index
    %c0_2 = arith.constant 0 : index
    %2 = vector.load %arg4[%c0_1, %c0_2] : memref<128x128xf32, #tpu.memory_space<vmem>>, vector<128x128xf32>
    %3 = arith.truncf %2 : vector<128x128xf32> to vector<128x128xbf16>
    %c0_3 = arith.constant 0 : index
    %c0_4 = arith.constant 0 : index
    %4 = vector.load %arg6[%c0_3, %c0_4] : memref<128x128xf32, #tpu.memory_space<vmem>>, vector<128x128xf32>
    %5 = arith.truncf %4 : vector<128x128xf32> to vector<128x128xbf16>
    %c0_5 = arith.constant 0 : index
    %c0_6 = arith.constant 0 : index
    %6 = vector.load %arg3[%c0_5, %c0_6] : memref<1x128xf32, #tpu.memory_space<vmem>>, vector<1x128xf32>
    %c0_7 = arith.constant 0 : index
    %c0_8 = arith.constant 0 : index
    %7 = vector.load %arg5[%c0_7, %c0_8] : memref<1x128xf32, #tpu.memory_space<vmem>>, vector<1x128xf32>
    %c0_9 = arith.constant 0 : index
    %c0_10 = arith.constant 0 : index
    %8 = vector.load %arg7[%c0_9, %c0_10] : memref<1x128xf32, #tpu.memory_space<vmem>>, vector<1x128xf32>
    %c0_11 = arith.constant 0 : index
    %c0_12 = arith.constant 0 : index
    %9 = vector.load %arg1[%c0_11, %c0_12] : memref<8x128xf32, #tpu.memory_space<vmem>>, vector<8x128xf32>
    %10 = arith.truncf %9 : vector<8x128xf32> to vector<8x128xbf16>
    %cst = arith.constant dense<0.000000e+00> : vector<8x128xf32>
    %11 = tpu.matmul %10, %1, %cst {dimension_numbers = #tpu.dot_dimension_numbers<[1], [0], [0], [1], [0, 0, 1, 1], [], []>} : vector<8x128xbf16>, vector<128x128xbf16>, vector<8x128xf32> -> vector<8x128xf32>
    %12 = vector.broadcast %6 : vector<1x128xf32> to vector<8x128xf32>
    %13 = arith.addf %11, %12 : vector<8x128xf32>
    %cst_13 = arith.constant 0.000000e+00 : f32
    %14 = vector.broadcast %cst_13 : f32 to vector<8x128xf32>
    %15 = arith.maximumf %13, %14 : vector<8x128xf32>
    %16 = arith.truncf %15 : vector<8x128xf32> to vector<8x128xbf16>
    %cst_14 = arith.constant dense<0.000000e+00> : vector<8x128xf32>
    %17 = tpu.matmul %16, %3, %cst_14 {dimension_numbers = #tpu.dot_dimension_numbers<[1], [0], [0], [1], [0, 0, 1, 1], [], []>} : vector<8x128xbf16>, vector<128x128xbf16>, vector<8x128xf32> -> vector<8x128xf32>
    %18 = vector.broadcast %7 : vector<1x128xf32> to vector<8x128xf32>
    %19 = arith.addf %17, %18 : vector<8x128xf32>
    %cst_15 = arith.constant 0.000000e+00 : f32
    %20 = vector.broadcast %cst_15 : f32 to vector<8x128xf32>
    %21 = arith.maximumf %19, %20 : vector<8x128xf32>
    %22 = arith.truncf %21 : vector<8x128xf32> to vector<8x128xbf16>
    %cst_16 = arith.constant dense<0.000000e+00> : vector<8x128xf32>
    %23 = tpu.matmul %22, %5, %cst_16 {dimension_numbers = #tpu.dot_dimension_numbers<[1], [0], [0], [1], [0, 0, 1, 1], [], []>} : vector<8x128xbf16>, vector<128x128xbf16>, vector<8x128xf32> -> vector<8x128xf32>
    %24 = vector.broadcast %8 : vector<1x128xf32> to vector<8x128xf32>
    %25 = arith.addf %23, %24 : vector<8x128xf32>
    %26 = math.tanh %25 : vector<8x128xf32>
    %cst_17 = arith.constant 1.500000e+00 : f32
    %27 = vector.broadcast %cst_17 : f32 to vector<8x128xf32>
    %28 = arith.mulf %26, %27 : vector<8x128xf32>
    %c0_18 = arith.constant 0 : index
    %c0_19 = arith.constant 0 : index
    %29 = vector.load %arg8[%c0_18, %c0_19] : memref<8x128xf32, #tpu.memory_space<vmem>>, vector<8x128xf32>
    tpu.vector_store %arg8[%c0_18, %c0_19], %28 {strides = array<i32>} : memref<8x128xf32, #tpu.memory_space<vmem>>, vector<8x128xf32>,
    return
  }
  func.func @transform_0(%arg0: i32) -> (i32, i32) {
    %c0_i32 = arith.constant 0 : i32
    %c0_i32_0 = arith.constant 0 : i32
    return %arg0, %c0_i32 : i32, i32
  }
  func.func @transform_1(%arg0: i32) -> (i32, i32) {
    %c0_i32 = arith.constant 0 : i32
    %c0_i32_0 = arith.constant 0 : i32
    %c0_i32_1 = arith.constant 0 : i32
    return %c0_i32, %c0_i32_0 : i32, i32
  }
  func.func @transform_2(%arg0: i32) -> (i32, i32) {
    %c0_i32 = arith.constant 0 : i32
    %c0_i32_0 = arith.constant 0 : i32
    %c0_i32_1 = arith.constant 0 : i32
    return %c0_i32, %c0_i32_0 : i32, i32
  }
  func.func @transform_3(%arg0: i32) -> (i32, i32) {
    %c0_i32 = arith.constant 0 : i32
    %c0_i32_0 = arith.constant 0 : i32
    %c0_i32_1 = arith.constant 0 : i32
    return %c0_i32, %c0_i32_0 : i32, i32
  }
  func.func @transform_4(%arg0: i32) -> (i32, i32) {
    %c0_i32 = arith.constant 0 : i32
    %c0_i32_0 = arith.constant 0 : i32
    %c0_i32_1 = arith.constant 0 : i32
    return %c0_i32, %c0_i32_0 : i32, i32
  }
  func.func @transform_5(%arg0: i32) -> (i32, i32) {
    %c0_i32 = arith.constant 0 : i32
    %c0_i32_0 = arith.constant 0 : i32
    %c0_i32_1 = arith.constant 0 : i32
    return %c0_i32, %c0_i32_0 : i32, i32
  }
  func.func @transform_6(%arg0: i32) -> (i32, i32) {
    %c0_i32 = arith.constant 0 : i32
    %c0_i32_0 = arith.constant 0 : i32
    %c0_i32_1 = arith.constant 0 : i32
    return %c0_i32, %c0_i32_0 : i32, i32
  }
  func.func @transform_7(%arg0: i32) -> (i32, i32) {
    %c0_i32 = arith.constant 0 : i32
    %c0_i32_0 = arith.constant 0 : i32
    return %arg0, %c0_i32 : i32, i32
  }
}

</mosaic_0001>

<llo_original>
// kernel: tpu_custom_call.1
$region0: #{tpu_custom_call.1}
  #allocation0 [shape = 'u32[]', space=smem, size = 0x4, offset = 0x4, fixed_abs, tag = 'smem constant byte address 0x4 - core index']
  #allocation1 [shape = 'u32[144,128]{1,0:T(1,128)}', space=vmem, size = 0x12000, scoped, tag = 'internal scratch']
  %s0 = inlined_call_operand.hbm [shape: f32[8,128], index: 0, kind: input, shape index: {}]
  %s1 = inlined_call_operand.hbm [shape: f32[128,128], index: 1, kind: input, shape index: {}]
  %s2 = inlined_call_operand.vmem [shape: f32[1,128], index: 2, kind: input, shape index: {}]
  %s3 = inlined_call_operand.hbm [shape: f32[128,128], index: 3, kind: input, shape index: {}]
  %s4 = inlined_call_operand.vmem [shape: f32[1,128], index: 4, kind: input, shape index: {}]
  %s5 = inlined_call_operand.hbm [shape: f32[128,128], index: 5, kind: input, shape index: {}]
  %s6 = inlined_call_operand.vmem [shape: f32[1,128], index: 6, kind: input, shape index: {}]
  %s7 = inlined_call_operand.hbm [shape: f32[8,128], index: 7, kind: output, shape index: {}]
  %s8 = sld [smem:[#allocation0]]
  $region54: #{tpu_custom_call.1} parent=0
    _
  %s10 = ssub.s32 1, %s8
  %s11 = scalar_select 0, %s10, %s8
  $region1: #{tpu_custom_call.1} parent=0
    #allocation2 [shape = 'u8[4096]{0}', space=vmem, size = 0x1000, scoped, tag = 'input window, operand 0, single buffered']
    #allocation3 [shape = 's32[1]{0}', space=sflag, size = 0x4, scoped, tag = 'scoped memory for tpu_custom_call.1']
    #allocation4 [shape = 's32[1]{0}', space=sflag, size = 0x4, scoped, tag = 'scoped memory for tpu_custom_call.1']
    #allocation5 [shape = 'u8[65536]{0}', space=vmem, size = 0x10000, scoped, tag = 'input window, operand 1, single buffered']
    #allocation6 [shape = 's32[1]{0}', space=sflag, size = 0x4, scoped, tag = 'scoped memory for tpu_custom_call.1']
    #allocation7 [shape = 'u8[65536]{0}', space=vmem, size = 0x10000, scoped, tag = 'input window, operand 3, single buffered']
    #allocation8 [shape = 'u8[65536]{0}', space=vmem, size = 0x10000, scoped, tag = 'input window, operand 5, single buffered']
    #allocation9 [shape = 's32[1]{0}', space=sflag, size = 0x4, scoped, tag = 'scoped memory for tpu_custom_call.1']
    #allocation10 [shape = 'u8[4096]{0}', space=vmem, size = 0x1000, scoped, tag = 'output window, operand 0, single buffered']
    %12 = vsyncpa [#allocation3], 0
    %13 = vsyncpa [#allocation6], 0
    %14 = vsyncpa [#allocation9], 0
    %15 = vsyncpa [#allocation4], 0
    // Predicated region
    $region2: #{tpu_custom_call.1} parent=1 // pred_check
      _
    $region3: #{tpu_custom_call.1} parent=1 // pred_check_branch
      %17 = sbr.rel (0) target = $region5
    $region4: #{tpu_custom_call.1} parent=1 // pred_region
      %s19 = ssub.s32 128, 128
      %20 = vsyncadd [#allocation3], %s19
      %s22 = sshll.u32 [#allocation2], 4
      %s23 = int_to_ptr.vmem [resolvable:$true] %s22
      %25 = dma.hbm_to_vmem [thread:$0]  %s0, 128, %s23, [#allocation3]
    $region5: #{tpu_custom_call.1} parent=1 // pred_fallthru
      _
    // Predicated region
    $region6: #{tpu_custom_call.1} parent=1 // pred_check
      _
    $region7: #{tpu_custom_call.1} parent=1 // pred_check_branch
      %27 = sbr.rel (0) target = $region9
    $region8: #{tpu_custom_call.1} parent=1 // pred_region
      %s29 = ssub.s32 2048, 2048
      %30 = vsyncadd [#allocation6], %s29
      %s31 = sshll.u32 [#allocation5], 4
      %s32 = int_to_ptr.vmem [resolvable:$true] %s31
      %37 = dma.hbm_to_vmem [thread:$0]  %s1, 2048, %s32, [#allocation6], 128, 128, 8
    $region9: #{tpu_custom_call.1} parent=1 // pred_fallthru
      _
    // Predicated region
    $region10: #{tpu_custom_call.1} parent=1 // pred_check
      _
    $region11: #{tpu_custom_call.1} parent=1 // pred_check_branch
      %39 = sbr.rel (0) target = $region13
    $region12: #{tpu_custom_call.1} parent=1 // pred_region
      _
    $region13: #{tpu_custom_call.1} parent=1 // pred_fallthru
      _
    // Predicated region
    $region14: #{tpu_custom_call.1} parent=1 // pred_check
      _
    $region15: #{tpu_custom_call.1} parent=1 // pred_check_branch
      %41 = sbr.rel (0) target = $region17
    $region16: #{tpu_custom_call.1} parent=1 // pred_region
      %s43 = ssub.s32 2048, 2048
      %44 = vsyncadd [#allocation6], %s43
      %s45 = sshll.u32 [#allocation7], 4
      %s46 = int_to_ptr.vmem [resolvable:$true] %s45
      %51 = dma.hbm_to_vmem [thread:$0]  %s3, 2048, %s46, [#allocation6], 128, 128, 8
    $region17: #{tpu_custom_call.1} parent=1 // pred_fallthru
      _
    // Predicated region
    $region18: #{tpu_custom_call.1} parent=1 // pred_check
      _
    $region19: #{tpu_custom_call.1} parent=1 // pred_check_branch
      %53 = sbr.rel (0) target = $region21
    $region20: #{tpu_custom_call.1} parent=1 // pred_region
      _
    $region21: #{tpu_custom_call.1} parent=1 // pred_fallthru
      _
    // Predicated region
    $region22: #{tpu_custom_call.1} parent=1 // pred_check
      _
    $region23: #{tpu_custom_call.1} parent=1 // pred_check_branch
      %55 = sbr.rel (0) target = $region25
    $region24: #{tpu_custom_call.1} parent=1 // pred_region
      %s57 = ssub.s32 2048, 2048
      %58 = vsyncadd [#allocation9], %s57
      %s59 = sshll.u32 [#allocation8], 4
      %s60 = int_to_ptr.vmem [resolvable:$true] %s59
      %65 = dma.hbm_to_vmem [thread:$0]  %s5, 2048, %s60, [#allocation9], 128, 128, 8
    $region25: #{tpu_custom_call.1} parent=1 // pred_fallthru
      _
    // Predicated region
    $region26: #{tpu_custom_call.1} parent=1 // pred_check
      _
    $region27: #{tpu_custom_call.1} parent=1 // pred_check_branch
      %67 = sbr.rel (0) target = $region29
    $region28: #{tpu_custom_call.1} parent=1 // pred_region
      _
    $region29: #{tpu_custom_call.1} parent=1 // pred_fallthru
      _
    // Predicated region
    $region30: #{tpu_custom_call.1} parent=1 // pred_check
      _
    $region31: #{tpu_custom_call.1} parent=1 // pred_check_branch
      %69 = sbr.rel (0) target = $region33
    $region32: #{tpu_custom_call.1} parent=1 // pred_region
      %70 = dma.done [#allocation3], 128
    $region33: #{tpu_custom_call.1} parent=1 // pred_fallthru
      _
    // Predicated region
    $region34: #{tpu_custom_call.1} parent=1 // pred_check
      _
    $region35: #{tpu_custom_call.1} parent=1 // pred_check_branch
      %72 = sbr.rel (0) target = $region37
    $region36: #{tpu_custom_call.1} parent=1 // pred_region
      %73 = dma.done [#allocation6], 2048
    $region37: #{tpu_custom_call.1} parent=1 // pred_fallthru
      _
    // Predicated region
    $region38: #{tpu_custom_call.1} parent=1 // pred_check
      _
    $region39: #{tpu_custom_call.1} parent=1 // pred_check_branch
      %75 = sbr.rel (0) target = $region41
    $region40: #{tpu_custom_call.1} parent=1 // pred_region
      %76 = dma.done [#allocation6], 2048
    $region41: #{tpu_custom_call.1} parent=1 // pred_fallthru
      _
    // Predicated region
    $region42: #{tpu_custom_call.1} parent=1 // pred_check
      _
    $region43: #{tpu_custom_call.1} parent=1 // pred_check_branch
      %78 = sbr.rel (0) target = $region45
    $region44: #{tpu_custom_call.1} parent=1 // pred_region
      %79 = dma.done [#allocation9], 2048
    $region45: #{tpu_custom_call.1} parent=1 // pred_fallthru
      _
    %v81 = vld [vmem:[#allocation5] sm:$0xff]
    %v82 = vld [vmem:[#allocation5 + $0x8] sm:$0xff]
    %v83 = vld [vmem:[#allocation5 + $0x10] sm:$0xff]
    %v84 = vld [vmem:[#allocation5 + $0x18] sm:$0xff]
    %v85 = vld [vmem:[#allocation5 + $0x20] sm:$0xff]
    %v86 = vld [vmem:[#allocation5 + $0x28] sm:$0xff]
    %v87 = vld [vmem:[#allocation5 + $0x30] sm:$0xff]
    %v88 = vld [vmem:[#allocation5 + $0x38] sm:$0xff]
    %v89 = vld [vmem:[#allocation5 + $0x40] sm:$0xff]
    %v90 = vld [vmem:[#allocation5 + $0x48] sm:$0xff]
    %v91 = vld [vmem:[#allocation5 + $0x50] sm:$0xff]
    %v92 = vld [vmem:[#allocation5 + $0x58] sm:$0xff]
    %v93 = vld [vmem:[#allocation5 + $0x60] sm:$0xff]
    %v94 = vld [vmem:[#allocation5 + $0x68] sm:$0xff]
    %v95 = vld [vmem:[#allocation5 + $0x70] sm:$0xff]
    %v96 = vld [vmem:[#allocation5 + $0x78] sm:$0xff]
    %v97 = vpack.c.bf16 %v82, %v81
    %v98 = vpack.c.bf16 %v84, %v83
    %v99 = vpack.c.bf16 %v86, %v85
    %v100 = vpack.c.bf16 %v88, %v87
    %v101 = vpack.c.bf16 %v90, %v89
    %v102 = vpack.c.bf16 %v92, %v91
    %v103 = vpack.c.bf16 %v94, %v93
    %v104 = vpack.c.bf16 %v96, %v95
    %v105 = vld [vmem:[#allocation7] sm:$0xff]
    %v106 = vld [vmem:[#allocation7 + $0x8] sm:$0xff]
    %v107 = vld [vmem:[#allocation7 + $0x10] sm:$0xff]
    %v108 = vld [vmem:[#allocation7 + $0x18] sm:$0xff]
    %v109 = vld [vmem:[#allocation7 + $0x20] sm:$0xff]
    %v110 = vld [vmem:[#allocation7 + $0x28] sm:$0xff]
    %v111 = vld [vmem:[#allocation7 + $0x30] sm:$0xff]
    %v112 = vld [vmem:[#allocation7 + $0x38] sm:$0xff]
    %v113 = vld [vmem:[#allocation7 + $0x40] sm:$0xff]
    %v114 = vld [vmem:[#allocation7 + $0x48] sm:$0xff]
    %v115 = vld [vmem:[#allocation7 + $0x50] sm:$0xff]
    %v116 = vld [vmem:[#allocation7 + $0x58] sm:$0xff]
    %v117 = vld [vmem:[#allocation7 + $0x60] sm:$0xff]
    %v118 = vld [vmem:[#allocation7 + $0x68] sm:$0xff]
    %v119 = vld [vmem:[#allocation7 + $0x70] sm:$0xff]
    %v120 = vld [vmem:[#allocation7 + $0x78] sm:$0xff]
    %v121 = vpack.c.bf16 %v106, %v105
    %v122 = vpack.c.bf16 %v108, %v107
    %v123 = vpack.c.bf16 %v110, %v109
    %v124 = vpack.c.bf16 %v112, %v111
    %v125 = vpack.c.bf16 %v114, %v113
    %v126 = vpack.c.bf16 %v116, %v115
    %v127 = vpack.c.bf16 %v118, %v117
    %v128 = vpack.c.bf16 %v120, %v119
    %v129 = vld [vmem:[#allocation8] sm:$0xff]
    %v130 = vld [vmem:[#allocation8 + $0x8] sm:$0xff]
    %v131 = vld [vmem:[#allocation8 + $0x10] sm:$0xff]
    %v132 = vld [vmem:[#allocation8 + $0x18] sm:$0xff]
    %v133 = vld [vmem:[#allocation8 + $0x20] sm:$0xff]
    %v134 = vld [vmem:[#allocation8 + $0x28] sm:$0xff]
    %v135 = vld [vmem:[#allocation8 + $0x30] sm:$0xff]
    %v136 = vld [vmem:[#allocation8 + $0x38] sm:$0xff]
    %v137 = vld [vmem:[#allocation8 + $0x40] sm:$0xff]
    %v138 = vld [vmem:[#allocation8 + $0x48] sm:$0xff]
    %v139 = vld [vmem:[#allocation8 + $0x50] sm:$0xff]
    %v140 = vld [vmem:[#allocation8 + $0x58] sm:$0xff]
    %v141 = vld [vmem:[#allocation8 + $0x60] sm:$0xff]
    %v142 = vld [vmem:[#allocation8 + $0x68] sm:$0xff]
    %v143 = vld [vmem:[#allocation8 + $0x70] sm:$0xff]
    %v144 = vld [vmem:[#allocation8 + $0x78] sm:$0xff]
    %v145 = vpack.c.bf16 %v130, %v129
    %v146 = vpack.c.bf16 %v132, %v131
    %v147 = vpack.c.bf16 %v134, %v133
    %v148 = vpack.c.bf16 %v136, %v135
    %v149 = vpack.c.bf16 %v138, %v137
    %v150 = vpack.c.bf16 %v140, %v139
    %v151 = vpack.c.bf16 %v142, %v141
    %v152 = vpack.c.bf16 %v144, %v143
    %v153 = vld [vmem:[%s2] sm:$0x1]
    %v154 = vld [vmem:[%s4] sm:$0x1]
    %v155 = vld [vmem:[%s6] sm:$0x1]
    %v156 = vld [vmem:[#allocation2] sm:$0xff]
    %v157 = vpack.c.bf16 %v156, %v156
    %v159 = vlaneseq
    %v160 = vshrl.u32 %v159, 7
    %v161 = vsub.s32 0, %v160
    %v162 = vrot.slane %v153, %v161
    %164 = vmatprep.subr.bf16.mxu0 0
    %165 = vmatpush1.bf16.msra.mxu0 %v97
    %166 = vmatprep.subr.bf16.mxu0 0
    %167 = vmatpush1.bf16.msra.mxu0 %v98
    %168 = vmatprep.subr.bf16.mxu0 0
    %169 = vmatpush1.bf16.msra.mxu0 %v99
    %170 = vmatprep.subr.bf16.mxu0 0
    %171 = vmatpush1.bf16.msra.mxu0 %v100
    %172 = vmatprep.subr.bf16.mxu0 0
    %173 = vmatpush1.bf16.msra.mxu0 %v101
    %174 = vmatprep.subr.bf16.mxu0 0
    %175 = vmatpush1.bf16.msra.mxu0 %v102
    %176 = vmatprep.subr.bf16.mxu0 0
    %177 = vmatpush1.bf16.msra.mxu0 %v103
    %178 = vmatprep.subr.bf16.mxu0 0
    %179 = vmatpush1.bf16.msra.mxu0 %v104
    %180 = vmatprep.subr.bf16.mxu0 0
    %181 = vmatpush1.bf16.msra.mxu0 0
    %182 = vmatprep.subr.bf16.mxu0 0
    %183 = vmatpush1.bf16.msra.mxu0 0
    %184 = vmatprep.subr.bf16.mxu0 0
    %185 = vmatpush1.bf16.msra.mxu0 0
    %186 = vmatprep.subr.bf16.mxu0 0
    %187 = vmatpush1.bf16.msra.mxu0 0
    %188 = vmatprep.subr.bf16.mxu0 0
    %189 = vmatpush1.bf16.msra.mxu0 0
    %190 = vmatprep.subr.bf16.mxu0 0
    %191 = vmatpush1.bf16.msra.mxu0 0
    %192 = vmatprep.subr.bf16.mxu0 0
    %193 = vmatpush1.bf16.msra.mxu0 0
    %194 = vmatprep.subr.bf16.mxu0 0
    %195 = vmatpush1.bf16.msra.mxu0 0
    %196 = vmatprep.mubr.bf16.mxu0 0
    %197 = vmatmul.mubr.bf16.gmra.mrb[0].mxu0 %v157
    %v198 = vpop.f32.mrb[0].mxu0
    %v199 = vadd.f32 %v162, %v198
    %v200 = vpop.f32.mrb[0].mxu0
    %v201 = vpop.f32.mrb[0].mxu0
    %v202 = vpop.f32.mrb[0].mxu0
    %203 = vdwg.mxu0
    %v204 = vmax.f32 %v199, 0.0
    %v205 = vpack.c.bf16 %v204, %v204
    %v207 = vlaneseq
    %v208 = vshrl.u32 %v207, 7
    %v209 = vsub.s32 0, %v208
    %v210 = vrot.slane %v154, %v209
    %212 = vmatprep.subr.bf16.mxu0 0
    %213 = vmatpush1.bf16.msra.mxu0 %v121
    %214 = vmatprep.subr.bf16.mxu0 0
    %215 = vmatpush1.bf16.msra.mxu0 %v122
    %216 = vmatprep.subr.bf16.mxu0 0
    %217 = vmatpush1.bf16.msra.mxu0 %v123
    %218 = vmatprep.subr.bf16.mxu0 0
    %219 = vmatpush1.bf16.msra.mxu0 %v124
    %220 = vmatprep.subr.bf16.mxu0 0
    %221 = vmatpush1.bf16.msra.mxu0 %v125
    %222 = vmatprep.subr.bf16.mxu0 0
    %223 = vmatpush1.bf16.msra.mxu0 %v126
    %224 = vmatprep.subr.bf16.mxu0 0
    %225 = vmatpush1.bf16.msra.mxu0 %v127
    %226 = vmatprep.subr.bf16.mxu0 0
    %227 = vmatpush1.bf16.msra.mxu0 %v128
    %228 = vmatprep.subr.bf16.mxu0 0
    %229 = vmatpush1.bf16.msra.mxu0 0
    %230 = vmatprep.subr.bf16.mxu0 0
    %231 = vmatpush1.bf16.msra.mxu0 0
    %232 = vmatprep.subr.bf16.mxu0 0
    %233 = vmatpush1.bf16.msra.mxu0 0
    %234 = vmatprep.subr.bf16.mxu0 0
    %235 = vmatpush1.bf16.msra.mxu0 0
    %236 = vmatprep.subr.bf16.mxu0 0
    %237 = vmatpush1.bf16.msra.mxu0 0
    %238 = vmatprep.subr.bf16.mxu0 0
    %239 = vmatpush1.bf16.msra.mxu0 0
    %240 = vmatprep.subr.bf16.mxu0 0
    %241 = vmatpush1.bf16.msra.mxu0 0
    %242 = vmatprep.subr.bf16.mxu0 0
    %243 = vmatpush1.bf16.msra.mxu0 0
    %244 = vmatprep.mubr.bf16.mxu0 0
    %245 = vmatmul.mubr.bf16.gmra.mrb[0].mxu0 %v205
    %v246 = vpop.f32.mrb[0].mxu0
    %v247 = vadd.f32 %v210, %v246
    %v248 = vpop.f32.mrb[0].mxu0
    %v249 = vpop.f32.mrb[0].mxu0
    %v250 = vpop.f32.mrb[0].mxu0
    %251 = vdwg.mxu0
    %v252 = vmax.f32 %v247, 0.0
    %v253 = vpack.c.bf16 %v252, %v252
    %v255 = vlaneseq
    %v256 = vshrl.u32 %v255, 7
    %v257 = vsub.s32 0, %v256
    %v258 = vrot.slane %v155, %v257
    %260 = vmatprep.subr.bf16.mxu0 0
    %261 = vmatpush1.bf16.msra.mxu0 %v145
    %262 = vmatprep.subr.bf16.mxu0 0
    %263 = vmatpush1.bf16.msra.mxu0 %v146
    %264 = vmatprep.subr.bf16.mxu0 0
    %265 = vmatpush1.bf16.msra.mxu0 %v147
    %266 = vmatprep.subr.bf16.mxu0 0
    %267 = vmatpush1.bf16.msra.mxu0 %v148
    %268 = vmatprep.subr.bf16.mxu0 0
    %269 = vmatpush1.bf16.msra.mxu0 %v149
    %270 = vmatprep.subr.bf16.mxu0 0
    %271 = vmatpush1.bf16.msra.mxu0 %v150
    %272 = vmatprep.subr.bf16.mxu0 0
    %273 = vmatpush1.bf16.msra.mxu0 %v151
    %274 = vmatprep.subr.bf16.mxu0 0
    %275 = vmatpush1.bf16.msra.mxu0 %v152
    %276 = vmatprep.subr.bf16.mxu0 0
    %277 = vmatpush1.bf16.msra.mxu0 0
    %278 = vmatprep.subr.bf16.mxu0 0
    %279 = vmatpush1.bf16.msra.mxu0 0
    %280 = vmatprep.subr.bf16.mxu0 0
    %281 = vmatpush1.bf16.msra.mxu0 0
    %282 = vmatprep.subr.bf16.mxu0 0
    %283 = vmatpush1.bf16.msra.mxu0 0
    %284 = vmatprep.subr.bf16.mxu0 0
    %285 = vmatpush1.bf16.msra.mxu0 0
    %286 = vmatprep.subr.bf16.mxu0 0
    %287 = vmatpush1.bf16.msra.mxu0 0
    %288 = vmatprep.subr.bf16.mxu0 0
    %289 = vmatpush1.bf16.msra.mxu0 0
    %290 = vmatprep.subr.bf16.mxu0 0
    %291 = vmatpush1.bf16.msra.mxu0 0
    %292 = vmatprep.mubr.bf16.mxu0 0
    %293 = vmatmul.mubr.bf16.gmra.mrb[0].mxu0 %v253
    %v294 = vpop.f32.mrb[0].mxu0
    %v295 = vadd.f32 %v258, %v294
    %v296 = vpop.f32.mrb[0].mxu0
    %v297 = vpop.f32.mrb[0].mxu0
    %v298 = vpop.f32.mrb[0].mxu0
    %299 = vdwg.mxu0
    %v300 = vtanh.pop %v295
    %v301 = vmul.f32 %v300, 1.5
    %302 = vst [vmem:[#allocation10] sm:$0xff] %v301
    // Predicated region
    $region46: #{tpu_custom_call.1} parent=1 // pred_check
      _
    $region47: #{tpu_custom_call.1} parent=1 // pred_check_branch
      %304 = sbr.rel (0) target = $region49
    $region48: #{tpu_custom_call.1} parent=1 // pred_region
      %s306 = ssub.s32 128, 128
      %307 = vsyncadd [#allocation4], %s306
      %s309 = sshll.u32 [#allocation10], 4
      %s310 = int_to_ptr.vmem [resolvable:$true] %s309
      %312 = dma.vmem_to_hbm [thread:$0]  %s310, 128, %s7, [#allocation4]
    $region49: #{tpu_custom_call.1} parent=1 // pred_fallthru
      _
    // Predicated region
    $region50: #{tpu_custom_call.1} parent=1 // pred_check
      _
    $region51: #{tpu_custom_call.1} parent=1 // pred_check_branch
      %314 = sbr.rel (0) target = $region53
    $region52: #{tpu_custom_call.1} parent=1 // pred_region
      %315 = dma.done [#allocation4], 128
    $region53: #{tpu_custom_call.1} parent=1 // pred_fallthru
      _
    %316 = vsyncpa [#allocation3], 1
    %317 = vsyncpa [#allocation6], 1
    %318 = vsyncpa [#allocation9], 1
    %319 = vsyncpa [#allocation4], 1

</llo_original>
